<compile_context>
chip_gen: v7x
topology: tpu7x:2x2x1
jax: 0.10.0
libtpu: 0.0.40
codegen_flags: <defaults>
</compile_context>

<pallas_src>
import math

import jax
import jax.numpy as jnp
from jax.experimental import pallas as pl
from jax.experimental.pallas import tpu as pltpu


def _round_up(n, m):
    return (n + m - 1) // m * m


def _cdiv(a, b):
    return -(-a // b)


# --------------------------------------------------------------------------------------
# Kernels
# --------------------------------------------------------------------------------------
def _twohot_kernel(se_ref, x_ref, pe_ref, wx_ref, b_ref, o_ref):
    # se_ref: (TM, 2) int32  -- col0 = start lane, col1 = (end-1) + max_len lane
    # x_ref:  (TM, Dp) f32/bf16    pe_ref: (Kp, Dp) bf16 (resident)
    # wx_ref: (Dp, Dp) bf16 (resident)   b_ref: (1, Dp) f32 (resident)
    # o_ref:  (TM, Dp) out_dtype
    tm = x_ref.shape[0]
    k_pad = pe_ref.shape[0]

    se = se_ref[...]
    s_lane = se[:, 0:1]
    e_lane = se[:, 1:2]                 # end offset already pre-applied on the host

    lane = jax.lax.broadcasted_iota(jnp.int32, (tm, k_pad), 1)
    twohot = jnp.logical_or(lane == s_lane, lane == e_lane).astype(jnp.bfloat16)

    acc = jnp.dot(x_ref[...].astype(jnp.bfloat16), wx_ref[...],
                  preferred_element_type=jnp.float32)
    acc = acc + jnp.dot(twohot, pe_ref[...], preferred_element_type=jnp.float32)
    o_ref[...] = (acc + b_ref[...]).astype(o_ref.dtype)


def _gathered_kernel(x_ref, peg_ref, wx_ref, b_ref, o_ref):
    # x_ref: (TM, Dp) f32/bf16    peg_ref: (TM, Dp) bf16 (host-gathered PE contribution)
    # wx_ref: (Dp, Dp) bf16 (resident)   b_ref: (1, Dp) f32 (resident)
    acc = jnp.dot(x_ref[...].astype(jnp.bfloat16), wx_ref[...],
                  preferred_element_type=jnp.float32)
    acc = acc + peg_ref[...].astype(jnp.float32)
    o_ref[...] = (acc + b_ref[...]).astype(o_ref.dtype)


# --------------------------------------------------------------------------------------
# Factory: one-time weight preparation + jitted apply
# --------------------------------------------------------------------------------------
def make_prop_positional_encoding(pe, fc_weight, fc_bias, *,
                                  block_rows=None,
                                  out_dtype=jnp.float32,
                                  use_twohot=None):
    """Builds a jitted forward(x, prop_s_e) equivalent to PropPositionalEncoding.forward.

    pe:        (max_len, dim_emb) f32
    fc_weight: (D, D + 2*dim_emb) f32 (PyTorch nn.Linear layout: out x in)
    fc_bias:   (D,) f32
    """
    pe = jnp.asarray(pe, jnp.float32)
    fc_weight = jnp.asarray(fc_weight, jnp.float32)
    fc_bias = jnp.asarray(fc_bias, jnp.float32)
    max_len, E = pe.shape
    D = fc_weight.shape[0]
    assert fc_weight.shape == (D, D + 2 * E), "fc_weight must be (D, D + 2*dim_emb)"

    if use_twohot is None:
        # Two-hot costs O(TM*2*max_len) VALU + O(TM*2*max_len*D) MXU work; switch to a
        # host-side gather once the folded PE table is wide (perf-review item).
        use_twohot = (2 * max_len) <= 1024

    D_pad = _round_up(D, 128)
    K_pad = _round_up(2 * max_len, 128)
    out_dtype = jnp.dtype(out_dtype)

    # ---- one-time weight preparation (hoisted out of the per-call path) ----
    wx_t = fc_weight[:, :D].T                       # (D, D)
    ws_t = fc_weight[:, D:D + E].T                  # (E, D)
    we_t = fc_weight[:, D + E:].T                   # (E, D)
    pe_proj_s = pe @ ws_t                           # (max_len, D) f32
    pe_proj_e = pe @ we_t                           # (max_len, D) f32

    wx_p = jnp.zeros((D_pad, D_pad), jnp.bfloat16).at[:D, :D].set(wx_t.astype(jnp.bfloat16))
    b_p = jnp.zeros((1, D_pad), jnp.float32).at[0, :D].set(fc_bias)
    if use_twohot:
        pe_proj_p = (jnp.zeros((K_pad, D_pad), jnp.bfloat16)
                     .at[:max_len, :D].set(pe_proj_s.astype(jnp.bfloat16))
                     .at[max_len:2 * max_len, :D].set(pe_proj_e.astype(jnp.bfloat16)))
        resident_bytes = wx_p.size * 2 + pe_proj_p.size * 2 + b_p.size * 4
    else:
        pe_proj_p = None
        resident_bytes = wx_p.size * 2 + b_p.size * 4

    # Single-buffer the residents (constant index_map) only when double-buffering them
    # would waste meaningful VMEM; for tiny residents the default pipeline is fine.
    res_spec_kwargs = {"pipeline_mode": pl.Buffered(1)} if resident_bytes > (2 << 20) else {}
    res_buf_factor = 1 if res_spec_kwargs else 2

    def apply(x, prop_s_e):
        # The PyTorch forward always returns the 2-D (all_num, D) tensor (the
        # reshape-back branch is dead code after x is reassigned) -- we match that.
        if x.ndim == 3:
            x2 = x.reshape(-1, x.shape[-1])
        else:
            x2 = x
        all_num = x2.shape[0]
        assert x2.shape[1] == D

        # ---- row tile: large (toward 512), >= 2 grid steps, VMEM-budgeted ----
        br = block_rows
        if br is None:
            if all_num > 8:
                br = min(512, _round_up(_cdiv(all_num, 2), 8))
            else:
                br = 8
        br = max(8, _round_up(br, 8))

        x_itemsize = jnp.dtype(x2.dtype).itemsize

        def _stream_bytes(r):                        # double-buffered streamed blocks
            per_row = D_pad * (x_itemsize + out_dtype.itemsize)
            per_row += (2 * 4) if use_twohot else (D_pad * 2)
            return 2 * r * per_row

        VMEM_BUDGET = 24 << 20                       # safe across v5e / v6e / v7x
        while br > 8 and resident_bytes * res_buf_factor + _stream_bytes(br) > VMEM_BUDGET:
            br = max(8, _round_up(br // 2, 8))

        rows_pad = _round_up(all_num, br)
        grid = (rows_pad // br,)
        needs_pad = (rows_pad != all_num) or (D_pad != D)

        if needs_pad:
            x_in = jnp.zeros((rows_pad, D_pad), x2.dtype).at[:all_num, :D].set(x2)
        else:
            x_in = x2                                # no extra host-side pass over x

        # Clamp indices to the valid range (differs from torch's negative-index wrap
        # only for invalid inputs).
        s_idx = jnp.clip(prop_s_e[:, 0].astype(jnp.int32), 0, max_len - 1)
        e_idx = jnp.clip(prop_s_e[:, 1].astype(jnp.int32) - 1, 0, max_len - 1)

        vmem_needed = resident_bytes * res_buf_factor + _stream_bytes(br)
        compiler_params = pltpu.CompilerParams(
            dimension_semantics=("parallel",),
            vmem_limit_bytes=int(min(max(vmem_needed + (4 << 20), 32 << 20), 128 << 20)),
        )

        if use_twohot:
            # end offset (-1 + max_len) pre-applied on the host (perf-review item).
            se = jnp.stack([s_idx, e_idx + max_len], axis=1)
            if rows_pad != all_num:
                # Padded rows keep (0, max_len): in-range lanes, rows sliced off below.
                se = jnp.zeros((rows_pad, 2), jnp.int32).at[:all_num].set(se)
            out_p = pl.pallas_call(
                _twohot_kernel,
                out_shape=jax.ShapeDtypeStruct((rows_pad, D_pad), out_dtype),
                grid_spec=pltpu.PrefetchScalarGridSpec(
                    num_scalar_prefetch=0,
                    grid=grid,
                    in_specs=[
                        pl.BlockSpec((br, 2), lambda i: (i, 0)),       # indices
                        pl.BlockSpec((br, D_pad), lambda i: (i, 0)),   # x rows
                        pl.BlockSpec((K_pad, D_pad), lambda i: (0, 0), **res_spec_kwargs),
                        pl.BlockSpec((D_pad, D_pad), lambda i: (0, 0), **res_spec_kwargs),
                        pl.BlockSpec((1, D_pad), lambda i: (0, 0), **res_spec_kwargs),
                    ],
                    out_specs=pl.BlockSpec((br, D_pad), lambda i: (i, 0)),
                ),
                compiler_params=compiler_params,
            )(se, x_in, pe_proj_p, wx_p, b_p)
        else:
            # Host-side gather of pre-projected PE rows, streamed as one bf16 block.
            pe_g = (jnp.take(pe_proj_s, s_idx, axis=0)
                    + jnp.take(pe_proj_e, e_idx, axis=0)).astype(jnp.bfloat16)
            if needs_pad:
                pe_g = jnp.zeros((rows_pad, D_pad), jnp.bfloat16).at[:all_num, :D].set(pe_g)
            out_p = pl.pallas_call(
                _gathered_kernel,
                out_shape=jax.ShapeDtypeStruct((rows_pad, D_pad), out_dtype),
                grid_spec=pltpu.PrefetchScalarGridSpec(
                    num_scalar_prefetch=0,
                    grid=grid,
                    in_specs=[
                        pl.BlockSpec((br, D_pad), lambda i: (i, 0)),   # x rows
                        pl.BlockSpec((br, D_pad), lambda i: (i, 0)),   # gathered PE rows
                        pl.BlockSpec((D_pad, D_pad), lambda i: (0, 0), **res_spec_kwargs),
                        pl.BlockSpec((1, D_pad), lambda i: (0, 0), **res_spec_kwargs),
                    ],
                    out_specs=pl.BlockSpec((br, D_pad), lambda i: (i, 0)),
                ),
                compiler_params=compiler_params,
            )(x_in, pe_g, wx_p, b_p)

        return out_p[:all_num, :D] if needs_pad else out_p

    return jax.jit(apply)


def make_pe_table(max_len, dim_emb):
    position = jnp.arange(max_len, dtype=jnp.float32)[:, None]
    div_term = jnp.exp(jnp.arange(0, dim_emb, 2, dtype=jnp.float32)
                       * (-math.log(10000.0) / dim_emb))
    pe = jnp.zeros((max_len, dim_emb), jnp.float32)
    pe = pe.at[:, 0::2].set(jnp.sin(position * div_term))
    pe = pe.at[:, 1::2].set(jnp.cos(position * div_term))
    return pe


if __name__ == "__main__":
    # Small shapes consistent with the module (scaled-down dim_in / dim_emb / max_len).
    dim_in, dim_emb, max_len = 32, 16, 16
    B, N = 2, 8
    all_num = B * N

    key = jax.random.PRNGKey(0)
    kx, kw, kb, ks, ke = jax.random.split(key, 5)

    x = jax.random.normal(kx, (B, N, dim_in), jnp.float32)

    # Deterministic parameter init (nn.Linear-style uniform).
    fan_in = dim_in + 2 * dim_emb
    bound = 1.0 / math.sqrt(fan_in)
    fc_weight = jax.random.uniform(kw, (dim_in, fan_in), jnp.float32, -bound, bound)
    fc_bias = jax.random.uniform(kb, (dim_in,), jnp.float32, -bound, bound)

    pe = make_pe_table(max_len, dim_emb)

    # Proposal (start, end) indices with 0 <= s < e <= max_len.
    s = jax.random.randint(ks, (all_num,), 0, max_len // 2)
    e = jax.random.randint(ke, (all_num,), max_len // 2 + 1, max_len + 1)
    prop_s_e = jnp.stack([s, e], axis=1).astype(jnp.int32)

    # Pure-JAX f32 reference (mirrors the PyTorch forward).
    x2d = x.reshape(-1, dim_in)
    pos_s = pe[prop_s_e[:, 0]]
    pos_e = pe[prop_s_e[:, 1] - 1]
    ref = jnp.concatenate([x2d, pos_s, pos_e], axis=-1) @ fc_weight.T + fc_bias

    # Path A: two-hot MXU gather (default for small max_len).  Default block_rows gives
    # an 8-row tile and a 2-step parallel grid here.
    fwd_twohot = make_prop_positional_encoding(pe, fc_weight, fc_bias, use_twohot=True)
    out_a = jax.block_until_ready(fwd_twohot(x, prop_s_e))

    # Path B: host-side gather of pre-projected PE rows (default for large max_len).
    fwd_gather = make_prop_positional_encoding(pe, fc_weight, fc_bias, use_twohot=False)
    out_b = jax.block_until_ready(fwd_gather(x, prop_s_e))

    assert out_a.shape == (all_num, dim_in)
    assert out_b.shape == (all_num, dim_in)
    # bf16 operands (f32 accumulation) => widened tolerance vs the f32 reference.
    for name, out in (("twohot", out_a), ("gather", out_b)):
        max_err = float(jnp.max(jnp.abs(out - ref)))
        assert jnp.allclose(out, ref, atol=5e-2, rtol=5e-2), (
            f"{name} path mismatch vs reference, max abs diff = {max_err}")
    print("KERNEL_OK")
</pallas_src>

<mosaic_0001>
module attributes {stable_mosaic.version = 11 : i64} {
  func.func @_twohot_kernel(%arg0: i32, %arg1: memref<8x2xi32, #tpu.memory_space<vmem>>, %arg2: memref<8x128xf32, #tpu.memory_space<vmem>>, %arg3: memref<128x128xbf16, #tpu.memory_space<vmem>>, %arg4: memref<128x128xbf16, #tpu.memory_space<vmem>>, %arg5: memref<1x128xf32, #tpu.memory_space<vmem>>, %arg6: memref<8x128xf32, #tpu.memory_space<vmem>>) attributes {dimension_semantics = [#tpu.dimension_semantics<parallel>], iteration_bounds = array<i64: 2>, scalar_prefetch = 0 : i64, scratch_operands = 0 : i64, tpu.core_type = #tpu.core_type<tc>, window_params = [{transform_indices = @transform_0, window_bounds = array<i64: 8, 2>}, {transform_indices = @transform_1, window_bounds = array<i64: 8, 128>}, {pipeline_mode = #tpu.pipeline_mode<synchronous>, transform_indices = @transform_2, window_bounds = array<i64: 128, 128>}, {pipeline_mode = #tpu.pipeline_mode<synchronous>, transform_indices = @transform_3, window_bounds = array<i64: 128, 128>}, {pipeline_mode = #tpu.pipeline_mode<synchronous>, transform_indices = @transform_4, window_bounds = array<i64: 1, 128>}, {transform_indices = @transform_5, window_bounds = array<i64: 8, 128>}]} {
    %c0 = arith.constant 0 : index
    %c0_0 = arith.constant 0 : index
    %0 = vector.load %arg1[%c0, %c0_0] : memref<8x2xi32, #tpu.memory_space<vmem>>, vector<8x2xi32>
    %1 = vector.extract_strided_slice %0 {offsets = [0, 0], sizes = [8, 1], strides = [1, 1]} : vector<8x2xi32> to vector<8x1xi32>
    %2 = vector.extract_strided_slice %0 {offsets = [0, 1], sizes = [8, 1], strides = [1, 1]} : vector<8x2xi32> to vector<8x1xi32>
    %3 = tpu.iota {dimensions = array<i32: 1>} : vector<8x128xi32>
    %4 = vector.broadcast %1 : vector<8x1xi32> to vector<8x128xi32>
    %5 = arith.cmpi eq, %3, %4 : vector<8x128xi32>
    %6 = vector.broadcast %2 : vector<8x1xi32> to vector<8x128xi32>
    %7 = arith.cmpi eq, %3, %6 : vector<8x128xi32>
    %8 = arith.ori %5, %7 : vector<8x128xi1>
    %9 = arith.extui %8 : vector<8x128xi1> to vector<8x128xi32>
    %10 = arith.sitofp %9 : vector<8x128xi32> to vector<8x128xf32>
    %11 = arith.truncf %10 : vector<8x128xf32> to vector<8x128xbf16>
    %c0_1 = arith.constant 0 : index
    %c0_2 = arith.constant 0 : index
    %12 = vector.load %arg2[%c0_1, %c0_2] : memref<8x128xf32, #tpu.memory_space<vmem>>, vector<8x128xf32>
    %13 = arith.truncf %12 : vector<8x128xf32> to vector<8x128xbf16>
    %c0_3 = arith.constant 0 : index
    %c0_4 = arith.constant 0 : index
    %14 = vector.load %arg4[%c0_3, %c0_4] : memref<128x128xbf16, #tpu.memory_space<vmem>>, vector<128x128xbf16>
    %cst = arith.constant dense<0.000000e+00> : vector<8x128xf32>
    %15 = tpu.matmul %13, %14, %cst {dimension_numbers = #tpu.dot_dimension_numbers<[1], [0], [0], [1], [0, 0, 1, 1], [], []>} : vector<8x128xbf16>, vector<128x128xbf16>, vector<8x128xf32> -> vector<8x128xf32>
    %c0_5 = arith.constant 0 : index
    %c0_6 = arith.constant 0 : index
    %16 = vector.load %arg3[%c0_5, %c0_6] : memref<128x128xbf16, #tpu.memory_space<vmem>>, vector<128x128xbf16>
    %cst_7 = arith.constant dense<0.000000e+00> : vector<8x128xf32>
    %17 = tpu.matmul %11, %16, %cst_7 {dimension_numbers = #tpu.dot_dimension_numbers<[1], [0], [0], [1], [0, 0, 1, 1], [], []>} : vector<8x128xbf16>, vector<128x128xbf16>, vector<8x128xf32> -> vector<8x128xf32>
    %18 = arith.addf %15, %17 : vector<8x128xf32>
    %c0_8 = arith.constant 0 : index
    %c0_9 = arith.constant 0 : index
    %19 = vector.load %arg5[%c0_8, %c0_9] : memref<1x128xf32, #tpu.memory_space<vmem>>, vector<1x128xf32>
    %20 = vector.broadcast %19 : vector<1x128xf32> to vector<8x128xf32>
    %21 = arith.addf %18, %20 : vector<8x128xf32>
    %c0_10 = arith.constant 0 : index
    %c0_11 = arith.constant 0 : index
    %22 = vector.load %arg6[%c0_10, %c0_11] : memref<8x128xf32, #tpu.memory_space<vmem>>, vector<8x128xf32>
    tpu.vector_store %arg6[%c0_10, %c0_11], %21 {strides = array<i32>} : memref<8x128xf32, #tpu.memory_space<vmem>>, vector<8x128xf32>,
    return
  }
  func.func @transform_0(%arg0: i32) -> (i32, i32) {
    %c0_i32 = arith.constant 0 : i32
    %c0_i32_0 = arith.constant 0 : i32
    return %arg0, %c0_i32 : i32, i32
  }
  func.func @transform_1(%arg0: i32) -> (i32, i32) {
    %c0_i32 = arith.constant 0 : i32
    %c0_i32_0 = arith.constant 0 : i32
    return %arg0, %c0_i32 : i32, i32
  }
  func.func @transform_2(%arg0: i32) -> (i32, i32) {
    %c0_i32 = arith.constant 0 : i32
    %c0_i32_0 = arith.constant 0 : i32
    %c0_i32_1 = arith.constant 0 : i32
    return %c0_i32, %c0_i32_0 : i32, i32
  }
  func.func @transform_3(%arg0: i32) -> (i32, i32) {
    %c0_i32 = arith.constant 0 : i32
    %c0_i32_0 = arith.constant 0 : i32
    %c0_i32_1 = arith.constant 0 : i32
    return %c0_i32, %c0_i32_0 : i32, i32
  }
  func.func @transform_4(%arg0: i32) -> (i32, i32) {
    %c0_i32 = arith.constant 0 : i32
    %c0_i32_0 = arith.constant 0 : i32
    %c0_i32_1 = arith.constant 0 : i32
    return %c0_i32, %c0_i32_0 : i32, i32
  }
  func.func @transform_5(%arg0: i32) -> (i32, i32) {
    %c0_i32 = arith.constant 0 : i32
    %c0_i32_0 = arith.constant 0 : i32
    return %arg0, %c0_i32 : i32, i32
  }
}

</mosaic_0001>

<llo_original>
// kernel: apply.1
$region0: #{apply.1}
  #allocation0 [shape = 'u32[]', space=smem, size = 0x4, offset = 0x4, fixed_abs, tag = 'smem constant byte address 0x4 - core index']
  #allocation1 [shape = 'u32[144,128]{1,0:T(1,128)}', space=vmem, size = 0x12000, scoped, tag = 'internal scratch']
  %s0 = inlined_call_operand.vmem [shape: s32[16,2], index: 0, kind: input, shape index: {}]
  %s1 = inlined_call_operand.vmem [shape: f32[16,128], index: 1, kind: input, shape index: {}]
  %s2 = inlined_call_operand.vmem [shape: bf16[128,128], index: 2, kind: input, shape index: {}]
  %s3 = inlined_call_operand.vmem [shape: bf16[128,128], index: 3, kind: input, shape index: {}]
  %s4 = inlined_call_operand.vmem [shape: f32[1,128], index: 4, kind: input, shape index: {}]
  %s5 = inlined_call_operand.hbm [shape: f32[16,128], index: 5, kind: output, shape index: {}]
  %s6 = sld [smem:[#allocation0]]
  $region53: #{apply.1} parent=0
    _
  %s8 = ssub.s32 1, %s6
  %s9 = scalar_select 0, %s8, %s6
  $region1: #{apply.1} parent=0
    #allocation2 [shape = 'u8[8192]{0}', space=vmem, size = 0x2000, scoped, tag = 'output window, operand 0']
    #allocation3 [shape = 's32[2]{0}', space=sflag, size = 0x8, scoped, tag = 'scoped memory for apply.1']
    %10 = vsyncpa [#allocation3], 0
    %s11 = scalar_lea.sflag [#allocation3], 1
    %12 = vsyncpa %s11, 0
    loop: start=0, step=1, limit=4
    $region2: #{apply.1} parent=1 // loop_pre_header
      _
    $region3: #{apply.1} parent=1 // loop_header
      %s14 = sphi 0, %s18
      %p15 = scmp.ge.s32.totalorder %s14, 4
      %s24 = sphi 0, %s26
      %s27 = sphi 0, %s24
      %s28 = sphi 0, %s27
      %s44 = sphi 0, %s28
      %s50 = sphi 0, %s52
      %s53 = sphi 0, %s50
      %s54 = sphi 0, %s53
      %s70 = sphi 0, %s54
      %s74 = sphi 0, %s74
      %s76 = sphi 0, %s74
      %s77 = sphi 0, %s76
      %s91 = sphi 0, %s77
      %s95 = sphi 0, %s95
      %s97 = sphi 0, %s95
      %s98 = sphi 0, %s97
      %s112 = sphi 0, %s98
      %s116 = sphi 0, %s116
      %s118 = sphi 0, %s116
      %s119 = sphi 0, %s118
      %s133 = sphi 0, %s119
      %s139 = sphi 0, %s141
      %s142 = sphi 0, %s139
      %s143 = sphi 0, %s142
      %s159 = sphi 0, %s143
    $region4: #{apply.1} parent=1 // loop_header_branch
      %17 = sbr.rel (%p15) target = $region8
    $region5: #{apply.1} parent=1 // loop_body
      %s19 = ssub.s32 %s14, 1
      %s20 = ssub.s32 %s14, 2
      %s21 = sadd.s32 %s14, 1
      %s22 = ssub.s32 %s14, %s21
      %p23 = scmp.eq.s32.totalorder %s22, 0
      %s25 = sadd.s32 %s24, 1
      %s26 = scalar_select %p23, %s24, %s25
      %p29 = pneg %p23
      %p30 = scmp.eq.s32.totalorder %s14, 1
      %p31 = por %p29, %p30
      %p32 = scmp.ne.s32.totalorder %s24, %s27
      %p33 = scmp.eq.s32.totalorder %s14, 0
      %p34 = por %p32, %p33
      %p35 = scmp.ne.s32.totalorder %s24, %s27
      %p36 = scmp.eq.s32.totalorder %s19, 1
      %p37 = por %p35, %p36
      %p38 = scmp.ne.s32.totalorder %s27, %s28
      %p39 = scmp.eq.s32.totalorder %s19, 0
      %p40 = por %p38, %p39
      %p41 = scmp.ne.s32.totalorder %s27, %s28
      %p42 = scmp.eq.s32.totalorder %s20, 1
      %p43 = por %p41, %p42
      %p45 = scmp.ne.s32.totalorder %s28, %s44
      %p46 = scmp.eq.s32.totalorder %s20, 0
      %p47 = por %p45, %p46
      %s48 = ssub.s32 %s14, %s21
      %p49 = scmp.eq.s32.totalorder %s48, 0
      %s51 = sadd.s32 %s50, 1
      %s52 = scalar_select %p49, %s50, %s51
      %p55 = pneg %p49
      %p56 = scmp.eq.s32.totalorder %s14, 1
      %p57 = por %p55, %p56
      %p58 = scmp.ne.s32.totalorder %s50, %s53
      %p59 = scmp.eq.s32.totalorder %s14, 0
      %p60 = por %p58, %p59
      %p61 = scmp.ne.s32.totalorder %s50, %s53
      %p62 = scmp.eq.s32.totalorder %s19, 1
      %p63 = por %p61, %p62
      %p64 = scmp.ne.s32.totalorder %s53, %s54
      %p65 = scmp.eq.s32.totalorder %s19, 0
      %p66 = por %p64, %p65
      %p67 = scmp.ne.s32.totalorder %s53, %s54
      %p68 = scmp.eq.s32.totalorder %s20, 1
      %p69 = por %p67, %p68
      %p71 = scmp.ne.s32.totalorder %s54, %s70
      %p72 = scmp.eq.s32.totalorder %s20, 0
      %p73 = por %p71, %p72
      %s75 = sadd.s32 %s74, 1
      %p78 = scmp.eq.s32.totalorder %s14, 1
      %p79 = scmp.ne.s32.totalorder %s74, %s76
      %p80 = scmp.eq.s32.totalorder %s14, 0
      %p81 = por %p79, %p80
      %p82 = scmp.ne.s32.totalorder %s74, %s76
      %p83 = scmp.eq.s32.totalorder %s19, 1
      %p84 = por %p82, %p83
      %p85 = scmp.ne.s32.totalorder %s76, %s77
      %p86 = scmp.eq.s32.totalorder %s19, 0
      %p87 = por %p85, %p86
      %p88 = scmp.ne.s32.totalorder %s76, %s77
      %p89 = scmp.eq.s32.totalorder %s20, 1
      %p90 = por %p88, %p89
      %p92 = scmp.ne.s32.totalorder %s77, %s91
      %p93 = scmp.eq.s32.totalorder %s20, 0
      %p94 = por %p92, %p93
      %s96 = sadd.s32 %s95, 1
      %p99 = scmp.eq.s32.totalorder %s14, 1
      %p100 = scmp.ne.s32.totalorder %s95, %s97
      %p101 = scmp.eq.s32.totalorder %s14, 0
      %p102 = por %p100, %p101
      %p103 = scmp.ne.s32.totalorder %s95, %s97
      %p104 = scmp.eq.s32.totalorder %s19, 1
      %p105 = por %p103, %p104
      %p106 = scmp.ne.s32.totalorder %s97, %s98
      %p107 = scmp.eq.s32.totalorder %s19, 0
      %p108 = por %p106, %p107
      %p109 = scmp.ne.s32.totalorder %s97, %s98
      %p110 = scmp.eq.s32.totalorder %s20, 1
      %p111 = por %p109, %p110
      %p113 = scmp.ne.s32.totalorder %s98, %s112
      %p114 = scmp.eq.s32.totalorder %s20, 0
      %p115 = por %p113, %p114
      %s117 = sadd.s32 %s116, 1
      %p120 = scmp.eq.s32.totalorder %s14, 1
      %p121 = scmp.ne.s32.totalorder %s116, %s118
      %p122 = scmp.eq.s32.totalorder %s14, 0
      %p123 = por %p121, %p122
      %p124 = scmp.ne.s32.totalorder %s116, %s118
      %p125 = scmp.eq.s32.totalorder %s19, 1
      %p126 = por %p124, %p125
      %p127 = scmp.ne.s32.totalorder %s118, %s119
      %p128 = scmp.eq.s32.totalorder %s19, 0
      %p129 = por %p127, %p128
      %p130 = scmp.ne.s32.totalorder %s118, %s119
      %p131 = scmp.eq.s32.totalorder %s20, 1
      %p132 = por %p130, %p131
      %p134 = scmp.ne.s32.totalorder %s119, %s133
      %p135 = scmp.eq.s32.totalorder %s20, 0
      %p136 = por %p134, %p135
      %s137 = ssub.s32 %s14, %s21
      %p138 = scmp.eq.s32.totalorder %s137, 0
      %s140 = sadd.s32 %s139, 1
      %s141 = scalar_select %p138, %s139, %s140
      %p144 = pneg %p138
      %p145 = scmp.eq.s32.totalorder %s14, 1
      %p146 = por %p144, %p145
      %p147 = scmp.ne.s32.totalorder %s139, %s142
      %p148 = scmp.eq.s32.totalorder %s14, 0
      %p149 = por %p147, %p148
      %p150 = scmp.ne.s32.totalorder %s139, %s142
      %p151 = scmp.eq.s32.totalorder %s19, 1
      %p152 = por %p150, %p151
      %p153 = scmp.ne.s32.totalorder %s142, %s143
      %p154 = scmp.eq.s32.totalorder %s19, 0
      %p155 = por %p153, %p154
      %p156 = scmp.ne.s32.totalorder %s142, %s143
      %p157 = scmp.eq.s32.totalorder %s20, 1
      %p158 = por %p156, %p157
      %p160 = scmp.ne.s32.totalorder %s143, %s159
      %p161 = scmp.eq.s32.totalorder %s20, 0
      %p162 = por %p160, %p161
      %p163 = scmp.le.s32.totalorder 1, %s14
      %p164 = scmp.lt.s32.totalorder %s14, 3
      %p165 = pnand %p163, %p164
      %p166 = pneg %p165
      // Predicated region
      $region9: #{apply.1} parent=5 // pred_check
        _
      $region10: #{apply.1} parent=5 // pred_check_branch
        %168 = sbr.rel (%p165) target = $region12
      $region11: #{apply.1} parent=5 // pred_region
        %s169 = ssub.s32 %s14, 1
        // Predicated region
        $region13: #{apply.1} parent=11 // pred_check
          %p170 = pneg %p87
        $region14: #{apply.1} parent=11 // pred_check_branch
          %172 = sbr.rel (%p170) target = $region16
        $region15: #{apply.1} parent=11 // pred_region
          _
        $region16: #{apply.1} parent=11 // pred_fallthru
          _
        // Predicated region
        $region17: #{apply.1} parent=11 // pred_check
          %p173 = pneg %p108
        $region18: #{apply.1} parent=11 // pred_check_branch
          %175 = sbr.rel (%p173) target = $region20
        $region19: #{apply.1} parent=11 // pred_region
          _
        $region20: #{apply.1} parent=11 // pred_fallthru
          _
        // Predicated region
        $region21: #{apply.1} parent=11 // pred_check
          %p176 = pneg %p129
        $region22: #{apply.1} parent=11 // pred_check_branch
          %178 = sbr.rel (%p176) target = $region24
        $region23: #{apply.1} parent=11 // pred_region
          _
        $region24: #{apply.1} parent=11 // pred_fallthru
          _
      $region12: #{apply.1} parent=5 // pred_fallthru
        _
      %p179 = scmp.lt.s32.totalorder %s14, 2
      // Predicated region
      $region25: #{apply.1} parent=5 // pred_check
        %p180 = pneg %p179
      $region26: #{apply.1} parent=5 // pred_check_branch
        %182 = sbr.rel (%p180) target = $region28
      $region27: #{apply.1} parent=5 // pred_region
        // Predicated region
        $region29: #{apply.1} parent=27 // pred_check
          %p183 = pneg %p34
        $region30: #{apply.1} parent=27 // pred_check_branch
          %185 = sbr.rel (%p183) target = $region32
        $region31: #{apply.1} parent=27 // pred_region
          %p186 = scmp.lt.s32.totalorder %s14, 1
          %s187 = scalar_select %p186, %s14, 1
          %s188 = smul.addr %s187, 8
          %s189 = scalar_lea.vmem %s0, %s188
        $region32: #{apply.1} parent=27 // pred_fallthru
          _
        // Predicated region
        $region33: #{apply.1} parent=27 // pred_check
          %p190 = pneg %p60
        $region34: #{apply.1} parent=27 // pred_check_branch
          %192 = sbr.rel (%p190) target = $region36
        $region35: #{apply.1} parent=27 // pred_region
          %p193 = scmp.lt.s32.totalorder %s14, 1
          %s194 = scalar_select %p193, %s14, 1
          %s195 = smul.addr %s194, 8
          %s196 = scalar_lea.vmem %s1, %s195
        $region36: #{apply.1} parent=27 // pred_fallthru
          _
      $region28: #{apply.1} parent=5 // pred_fallthru
        _
      %p197 = scmp.le.s32.totalorder 1, %s14
      %p198 = scmp.lt.s32.totalorder %s14, 3
      %p199 = pnand %p197, %p198
      %p200 = pneg %p199
      // Predicated region
      $region37: #{apply.1} parent=5 // pred_check
        _
      $region38: #{apply.1} parent=5 // pred_check_branch
        %202 = sbr.rel (%p199) target = $region40
      $region39: #{apply.1} parent=5 // pred_region
        %s203 = ssub.s32 %s14, 1
        %p204 = scmp.lt.s32.totalorder %s19, 1
        %s205 = scalar_select %p204, %s19, 1
        %s206 = smul.addr %s205, 8
        %s207 = scalar_lea.vmem %s0, %s206
        %p208 = pneg %p40
        %p209 = pneg %p37
        %p210 = scmp.lt.s32.totalorder %s19, 1
        %s211 = scalar_select %p210, %s19, 1
        %s212 = smul.addr %s211, 8
        %s213 = scalar_lea.vmem %s1, %s212
        %p214 = pneg %p66
        %p215 = pneg %p63
        %p216 = pneg %p87
        %p217 = pneg %p84
        %p218 = pneg %p108
        %p219 = pneg %p105
        %p220 = pneg %p129
        %p221 = pneg %p126
        %p222 = pneg %p155
        %p223 = pneg %p152
        %s224 = sand.u32 %s142, 1
        %s225 = scalar_lea.sflag [#allocation3], %s224
        %s226 = sand.u32 %s142, 1
        %s227 = smul.addr %s226, 8
        %s228 = scalar_lea.vmem [#allocation2], %s227
        %p229 = scmp.lt.s32.totalorder %s19, 1
        %s230 = scalar_select %p229, %s19, 1
        %s231 = smul.addr %s230, 8
        %s232 = scalar_lea.vmem %s0, %s231
        %p233 = scmp.lt.s32.totalorder %s19, 1
        %s234 = scalar_select %p233, %s19, 1
        %s235 = smul.addr %s234, 8
        %s236 = scalar_lea.vmem %s1, %s235
        %v238 = vld [vmem:[%s232] sm:$0xff]
        %v239 = vlaneseq
        %v240 = vand.u32 %v239, 127
        %241 = vset.pattern.permute.xlu0 0
        %242 = vperm.xlu0 %241, %v238
        %v243 = vpop.permute.xlu0 %242
        %vm244 = vcmp.eq.s32.totalorder %v240, %v243
        %245 = vset.pattern.permute.xlu0 1
        %246 = vperm.xlu0 %245, %v238
        %v247 = vpop.permute.xlu0 %246
        %vm248 = vcmp.eq.s32.totalorder %v240, %v247
        %vm249 = vmor %vm244, %vm248
        %v250 = vsel %vm249, 1, 0
        %v251 = vcvt.s32.f32 %v250
        %v252 = vpack.c.bf16 %v251, %v251
        %v253 = vld [vmem:[%s236] sm:$0xff]
        %v254 = vpack.c.bf16 %v253, %v253
        %v255 = vld [vmem:[%s3] sm:$0xf]
        %v256 = vld [vmem:[%s3 + $0x4] sm:$0xf]
        %v257 = vld [vmem:[%s3 + $0x8] sm:$0xf]
        %v258 = vld [vmem:[%s3 + $0xc] sm:$0xf]
        %v259 = vld [vmem:[%s3 + $0x10] sm:$0xf]
        %v260 = vld [vmem:[%s3 + $0x14] sm:$0xf]
        %v261 = vld [vmem:[%s3 + $0x18] sm:$0xf]
        %v262 = vld [vmem:[%s3 + $0x1c] sm:$0xf]
        %v263 = vld [vmem:[%s3 + $0x20] sm:$0xf]
        %v264 = vld [vmem:[%s3 + $0x24] sm:$0xf]
        %v265 = vld [vmem:[%s3 + $0x28] sm:$0xf]
        %v266 = vld [vmem:[%s3 + $0x2c] sm:$0xf]
        %v267 = vld [vmem:[%s3 + $0x30] sm:$0xf]
        %v268 = vld [vmem:[%s3 + $0x34] sm:$0xf]
        %v269 = vld [vmem:[%s3 + $0x38] sm:$0xf]
        %v270 = vld [vmem:[%s3 + $0x3c] sm:$0xf]
        %v271 = vld [vmem:[%s2] sm:$0xf]
        %v272 = vld [vmem:[%s2 + $0x4] sm:$0xf]
        %v273 = vld [vmem:[%s2 + $0x8] sm:$0xf]
        %v274 = vld [vmem:[%s2 + $0xc] sm:$0xf]
        %v275 = vld [vmem:[%s2 + $0x10] sm:$0xf]
        %v276 = vld [vmem:[%s2 + $0x14] sm:$0xf]
        %v277 = vld [vmem:[%s2 + $0x18] sm:$0xf]
        %v278 = vld [vmem:[%s2 + $0x1c] sm:$0xf]
        %v279 = vld [vmem:[%s2 + $0x20] sm:$0xf]
        %v280 = vld [vmem:[%s2 + $0x24] sm:$0xf]
        %v281 = vld [vmem:[%s2 + $0x28] sm:$0xf]
        %v282 = vld [vmem:[%s2 + $0x2c] sm:$0xf]
        %v283 = vld [vmem:[%s2 + $0x30] sm:$0xf]
        %v284 = vld [vmem:[%s2 + $0x34] sm:$0xf]
        %v285 = vld [vmem:[%s2 + $0x38] sm:$0xf]
        %v286 = vld [vmem:[%s2 + $0x3c] sm:$0xf]
        %v303 = vunpack.c.l.b16 %v271
        %v304 = vunpack.c.l.b16 %v272
        %v305 = vunpack.c.l.b16 %v273
        %v306 = vunpack.c.l.b16 %v274
        %v307 = vunpack.c.l.b16 %v275
        %v308 = vunpack.c.l.b16 %v276
        %v309 = vunpack.c.l.b16 %v277
        %v310 = vunpack.c.l.b16 %v278
        %v311 = vunpack.c.l.b16 %v279
        %v312 = vunpack.c.l.b16 %v280
        %v313 = vunpack.c.l.b16 %v281
        %v314 = vunpack.c.l.b16 %v282
        %v315 = vunpack.c.l.b16 %v283
        %v316 = vunpack.c.l.b16 %v284
        %v317 = vunpack.c.l.b16 %v285
        %v318 = vunpack.c.l.b16 %v286
        %v319 = vpack.c.b16 %v304, %v303
        %v320 = vpack.c.b16 %v306, %v305
        %v321 = vpack.c.b16 %v308, %v307
        %v322 = vpack.c.b16 %v310, %v309
        %v323 = vpack.c.b16 %v312, %v311
        %v324 = vpack.c.b16 %v314, %v313
        %v325 = vpack.c.b16 %v316, %v315
        %v326 = vpack.c.b16 %v318, %v317
        %335 = vmatprep.subr.bf16.mxu0 0
        %336 = vmatpush1.bf16.msra.mxu0 %v319
        %337 = vmatprep.subr.bf16.mxu0 0
        %338 = vmatpush1.bf16.msra.mxu0 %v320
        %339 = vmatprep.subr.bf16.mxu0 0
        %340 = vmatpush1.bf16.msra.mxu0 %v321
        %341 = vmatprep.subr.bf16.mxu0 0
        %342 = vmatpush1.bf16.msra.mxu0 %v322
        %343 = vmatprep.subr.bf16.mxu0 0
        %344 = vmatpush1.bf16.msra.mxu0 %v323
        %345 = vmatprep.subr.bf16.mxu0 0
        %346 = vmatpush1.bf16.msra.mxu0 %v324
        %347 = vmatprep.subr.bf16.mxu0 0
        %348 = vmatpush1.bf16.msra.mxu0 %v325
        %349 = vmatprep.subr.bf16.mxu0 0
        %350 = vmatpush1.bf16.msra.mxu0 %v326
        %351 = vmatprep.subr.bf16.mxu0 0
        %352 = vmatpush1.bf16.msra.mxu0 0
        %353 = vmatprep.subr.bf16.mxu0 0
        %354 = vmatpush1.bf16.msra.mxu0 0
        %355 = vmatprep.subr.bf16.mxu0 0
        %356 = vmatpush1.bf16.msra.mxu0 0
        %357 = vmatprep.subr.bf16.mxu0 0
        %358 = vmatpush1.bf16.msra.mxu0 0
        %359 = vmatprep.subr.bf16.mxu0 0
        %360 = vmatpush1.bf16.msra.mxu0 0
        %361 = vmatprep.subr.bf16.mxu0 0
        %362 = vmatpush1.bf16.msra.mxu0 0
        %363 = vmatprep.subr.bf16.mxu0 0
        %364 = vmatpush1.bf16.msra.mxu0 0
        %365 = vmatprep.subr.bf16.mxu0 0
        %366 = vmatpush1.bf16.msra.mxu0 0
        %367 = vmatprep.mubr.bf16.mxu0 0
        %368 = vmatmul.mubr.bf16.gmra.mrb[0].mxu0 %v252
        %v369 = vpop.f32.mrb[0].mxu0
        %v370 = vadd.f32 0.0, %v369
        %v371 = vpop.f32.mrb[0].mxu0
        %v372 = vpop.f32.mrb[0].mxu0
        %v373 = vpop.f32.mrb[0].mxu0
        %374 = vdwg.mxu0
        %v391 = vunpack.c.l.b16 %v255
        %v392 = vunpack.c.l.b16 %v256
        %v393 = vunpack.c.l.b16 %v257
        %v394 = vunpack.c.l.b16 %v258
        %v395 = vunpack.c.l.b16 %v259
        %v396 = vunpack.c.l.b16 %v260
        %v397 = vunpack.c.l.b16 %v261
        %v398 = vunpack.c.l.b16 %v262
        %v399 = vunpack.c.l.b16 %v263
        %v400 = vunpack.c.l.b16 %v264
        %v401 = vunpack.c.l.b16 %v265
        %v402 = vunpack.c.l.b16 %v266
        %v403 = vunpack.c.l.b16 %v267
        %v404 = vunpack.c.l.b16 %v268
        %v405 = vunpack.c.l.b16 %v269
        %v406 = vunpack.c.l.b16 %v270
        %v407 = vpack.c.b16 %v392, %v391
        %v408 = vpack.c.b16 %v394, %v393
        %v409 = vpack.c.b16 %v396, %v395
        %v410 = vpack.c.b16 %v398, %v397
        %v411 = vpack.c.b16 %v400, %v399
        %v412 = vpack.c.b16 %v402, %v401
        %v413 = vpack.c.b16 %v404, %v403
        %v414 = vpack.c.b16 %v406, %v405
        %423 = vmatprep.subr.bf16.mxu0 0
        %424 = vmatpush1.bf16.msra.mxu0 %v407
        %425 = vmatprep.subr.bf16.mxu0 0
        %426 = vmatpush1.bf16.msra.mxu0 %v408
        %427 = vmatprep.subr.bf16.mxu0 0
        %428 = vmatpush1.bf16.msra.mxu0 %v409
        %429 = vmatprep.subr.bf16.mxu0 0
        %430 = vmatpush1.bf16.msra.mxu0 %v410
        %431 = vmatprep.subr.bf16.mxu0 0
        %432 = vmatpush1.bf16.msra.mxu0 %v411
        %433 = vmatprep.subr.bf16.mxu0 0
        %434 = vmatpush1.bf16.msra.mxu0 %v412
        %435 = vmatprep.subr.bf16.mxu0 0
        %436 = vmatpush1.bf16.msra.mxu0 %v413
        %437 = vmatprep.subr.bf16.mxu0 0
        %438 = vmatpush1.bf16.msra.mxu0 %v414
        %439 = vmatprep.subr.bf16.mxu0 0
        %440 = vmatpush1.bf16.msra.mxu0 0
        %441 = vmatprep.subr.bf16.mxu0 0
        %442 = vmatpush1.bf16.msra.mxu0 0
        %443 = vmatprep.subr.bf16.mxu0 0
        %444 = vmatpush1.bf16.msra.mxu0 0
        %445 = vmatprep.subr.bf16.mxu0 0
        %446 = vmatpush1.bf16.msra.mxu0 0
        %447 = vmatprep.subr.bf16.mxu0 0
        %448 = vmatpush1.bf16.msra.mxu0 0
        %449 = vmatprep.subr.bf16.mxu0 0
        %450 = vmatpush1.bf16.msra.mxu0 0
        %451 = vmatprep.subr.bf16.mxu0 0
        %452 = vmatpush1.bf16.msra.mxu0 0
        %453 = vmatprep.subr.bf16.mxu0 0
        %454 = vmatpush1.bf16.msra.mxu0 0
        %455 = vmatprep.mubr.bf16.mxu0 0
        %456 = vmatmul.mubr.bf16.gmra.mrb[0].mxu0 %v254
        %v457 = vpop.f32.mrb[0].mxu0
        %v458 = vadd.f32 %v370, %v457
        %v459 = vpop.f32.mrb[0].mxu0
        %v460 = vpop.f32.mrb[0].mxu0
        %v461 = vpop.f32.mrb[0].mxu0
        %462 = vdwg.mxu0
        %v463 = vld [vmem:[%s4] sm:$0x1]
        %v465 = vlaneseq
        %v466 = vshrl.u32 %v465, 7
        %v467 = vsub.s32 0, %v466
        %v468 = vrot.slane %v463, %v467
        %v470 = vadd.f32 %v458, %v468
        %471 = vst [vmem:[%s228] sm:$0xff] %v470
        %s472 = sand.u32 %s142, 1
        %s473 = scalar_lea.sflag [#allocation3], %s472
        %s474 = sand.u32 %s142, 1
        %s475 = smul.addr %s474, 8
        %s476 = scalar_lea.vmem [#allocation2], %s475
        // Predicated region
        $region41: #{apply.1} parent=39 // pred_check
          %p477 = pneg %p152
        $region42: #{apply.1} parent=39 // pred_check_branch
          %479 = sbr.rel (%p477) target = $region44
        $region43: #{apply.1} parent=39 // pred_region
          %s481 = ssub.s32 128, 128
          %482 = vsyncadd %s473, %s481
          %s483 = smul.addr %s19, 128
          %s484 = scalar_lea.hbm %s5, %s483
          %s486 = sshll.u32 %s476, 4
          %s487 = int_to_ptr.vmem [resolvable:$true] %s486
          %489 = dma.vmem_to_hbm [thread:$0]  %s487, 128, %s484, %s473
        $region44: #{apply.1} parent=39 // pred_fallthru
          _
      $region40: #{apply.1} parent=5 // pred_fallthru
        _
      %p490 = scmp.le.s32.totalorder 2, %s14
      // Predicated region
      $region45: #{apply.1} parent=5 // pred_check
        %p491 = pneg %p490
      $region46: #{apply.1} parent=5 // pred_check_branch
        %493 = sbr.rel (%p491) target = $region48
      $region47: #{apply.1} parent=5 // pred_region
        %s494 = ssub.s32 %s14, 2
        // Predicated region
        $region49: #{apply.1} parent=47 // pred_check
          %p495 = pneg %p158
        $region50: #{apply.1} parent=47 // pred_check_branch
          %497 = sbr.rel (%p495) target = $region52
        $region51: #{apply.1} parent=47 // pred_region
          %s498 = sand.u32 %s143, 1
          %s499 = scalar_lea.sflag [#allocation3], %s498
          %s500 = sand.u32 %s143, 1
          %s501 = smul.addr %s500, 8
          %s502 = scalar_lea.vmem [#allocation2], %s501
          %503 = dma.done %s499, 128
        $region52: #{apply.1} parent=47 // pred_fallthru
          _
      $region48: #{apply.1} parent=5 // pred_fallthru
        _
    $region6: #{apply.1} parent=1 // loop_footer
      %s18 = sadd.s32 1, %s14
    $region7: #{apply.1} parent=1 // loop_footer_branch
      %13 = sbr.rel target = $region3
    $region8: #{apply.1} parent=1 // loop_exit
      _
    %504 = vsyncpa [#allocation3], 1
    %s505 = scalar_lea.sflag [#allocation3], 1
    %506 = vsyncpa %s505, 1

</llo_original>
